<compile_context>
chip_gen: v5e
topology: v5e:2x2
jax: 0.10.0
libtpu: 0.0.40
codegen_flags: <defaults>
</compile_context>

<pallas_src>
import functools
import math

import jax
import jax.numpy as jnp
from jax.experimental import pallas as pl
from jax.experimental.pallas import tpu as pltpu

# ---------------------------------------------------------------------------
# Tile sizing
# ---------------------------------------------------------------------------
_TARGET_BLOCK_BYTES = 1 << 20   # ~1 MiB output block (~85% of HBM roofline)
_MAX_TILE_ROWS = 1024           # bounds lane-padded VMEM temps when D is tiny
_MIN_TILE_ROWS = 8              # sublane quantum


def _pick_tile_rows(rows_total: int, d: int) -> int:
    """Rows per grid step: ~1 MiB lane-dense output blocks, >=2 steps for v7x."""
    if rows_total <= _MIN_TILE_ROWS:
        return rows_total                           # full dim (always legal)
    d_eff = max(128, ((d + 127) // 128) * 128)      # lane-padded VMEM width
    ts = _TARGET_BLOCK_BYTES // (4 * d_eff)
    ts = min(ts, _MAX_TILE_ROWS)
    # keep >= 2 grid steps so both v7x TensorCores get work
    ts = min(ts, max(_MIN_TILE_ROWS, (rows_total // 2) // 8 * 8))
    ts = max(_MIN_TILE_ROWS, (ts // 8) * 8)
    return ts


# ---------------------------------------------------------------------------
# Shared-range-reduction sincos (VPU-friendly; one reduction feeds both polys)
# ---------------------------------------------------------------------------
_TWO_OVER_PI = 0.6366197723675814
# Cody-Waite split of pi/2 (2x cephes single-precision DP1/DP2/DP3 for pi/4).
_PIO2_1 = 1.5703125
_PIO2_2 = 4.837512969970703125e-4
_PIO2_3 = 7.54978995489188216e-8
# cephes sinf / cosf minimax coefficients, valid for |r| <= pi/4.
_SIN_C = (-1.9515295891e-4, 8.3321608736e-3, -1.6666654611e-1)
_COS_C = (2.443315711809948e-5, -1.388731625493765e-3, 4.166664568298827e-2)


def _sincos(x):
    """Return (sin(x), cos(x)) from a single shared pi/2 range reduction."""
    n = jnp.floor(x * _TWO_OVER_PI + 0.5)           # nearest quadrant count
    ni = n.astype(jnp.int32)
    r = ((x - n * _PIO2_1) - n * _PIO2_2) - n * _PIO2_3
    z = r * r
    s0, s1, s2 = _SIN_C
    c0, c1, c2 = _COS_C
    sin_r = ((s0 * z + s1) * z + s2) * z * r + r
    cos_r = ((c0 * z + c1) * z + c2) * (z * z) - 0.5 * z + 1.0
    swap = (ni & 1) == 1
    sin_b = jnp.where(swap, cos_r, sin_r)
    cos_b = jnp.where(swap, sin_r, cos_r)
    sin_v = jnp.where((ni & 2) == 0, sin_b, -sin_b)
    cos_v = jnp.where(((ni + 1) & 2) == 0, cos_b, -cos_b)
    return sin_v, cos_v


def _finish_and_store(scaled, out_ref, valid=None):
    h = scaled.shape[-1]
    sin_v, cos_v = _sincos(scaled)
    if valid is not None:                           # odd-hidden_size pad rows -> 0
        sin_v = sin_v * valid
        cos_v = cos_v * valid
    # Unmasked, lane-aligned stores when H % 128 == 0 (TimesFM hidden=1280 -> H=640).
    # TODO(synk): lane-dense dual-output fallback for H % 128 != 0 (tiny widths).
    out_ref[:, :h] = sin_v.astype(out_ref.dtype)
    out_ref[:, h:] = cos_v.astype(out_ref.dtype)


# ---------------------------------------------------------------------------
# Kernels (row-flattened: blocks are (TS, D))
# ---------------------------------------------------------------------------
def _posemb_pos_kernel(*refs, masked):
    if masked:
        pos_ref, valid_ref, inv_ref, out_ref = refs
        valid = valid_ref[...]                      # (TS, 1) f32
    else:
        pos_ref, inv_ref, out_ref = refs
        valid = None
    pos = pos_ref[...].astype(jnp.float32)          # cast in-kernel (int -> f32)
    # (TS,1) * (1,H) lane/sublane splat broadcast.
    # TODO(synk): if a bundle dump shows VALU saturation from this broadcast,
    # move it to the idle MXU via a rank-1 dot_general.
    scaled = pos * inv_ref[...]
    _finish_and_store(scaled, out_ref, valid)


def _posemb_iota_kernel(inv_ref, out_ref, *, tile_rows, s_len, masked):
    row0 = pl.program_id(0) * tile_rows
    rows_i = jax.lax.broadcasted_iota(jnp.int32, (tile_rows, 1), 0) + row0
    pos = rows_i.astype(jnp.float32)                # positions generated in-kernel
    scaled = pos * inv_ref[...]
    valid = (rows_i < s_len).astype(jnp.float32) if masked else None
    _finish_and_store(scaled, out_ref, valid)


# ---------------------------------------------------------------------------
# Module wrapper
# ---------------------------------------------------------------------------
class TimesFmPositionalEmbeddingPallas:
    """Pallas/TPU implementation of TimesFmPositionalEmbedding forward."""

    def __init__(self, hidden_size: int, min_timescale: float = 1.0,
                 max_timescale: float = 10000.0, output_dtype=jnp.float32):
        self.embedding_dims = int(hidden_size)
        # output_dtype=jnp.bfloat16 halves writeback bytes (big win on v5e);
        # default float32 matches the PyTorch reference exactly.
        self.output_dtype = output_dtype
        num_timescales = self.embedding_dims // 2
        log_timescale_increment = math.log(
            float(max_timescale) / float(min_timescale)
        ) / max(num_timescales - 1, 1)
        self.inv_timescales = (
            min_timescale
            * jnp.exp(jnp.arange(num_timescales, dtype=jnp.float32)
                      * -log_timescale_increment)
        ).reshape(1, num_timescales)

    def __call__(self, seq_length=None, position=None):
        if position is None and seq_length is None:
            raise ValueError("Either position or seq_length must be provided")

        H = self.embedding_dims // 2
        D = 2 * H
        pad = self.embedding_dims % 2               # F.pad on the *sequence* dim

        if position is None:
            # ---- seq_length-only path: positions via in-kernel iota ----
            S = int(seq_length)
            s_pad = S + pad
            rows = s_pad
            TS = _pick_tile_rows(rows, D)
            n_r = pl.cdiv(rows, TS)
            kernel = functools.partial(
                _posemb_iota_kernel, tile_rows=TS, s_len=S, masked=bool(pad))
            signal = pl.pallas_call(
                kernel,
                out_shape=jax.ShapeDtypeStruct((rows, D), self.output_dtype),
                grid_spec=pltpu.PrefetchScalarGridSpec(
                    num_scalar_prefetch=0,
                    grid=(n_r,),
                    in_specs=[pl.BlockSpec((1, H), lambda r: (0, 0))],
                    # NOTE: pipeline_mode=pl.Buffered(3) here is a small extra
                    # win on v6e if writeback is exposed; default (2) kept.
                    out_specs=pl.BlockSpec((TS, D), lambda r: (r, 0)),
                ),
                compiler_params=pltpu.CompilerParams(
                    dimension_semantics=("parallel",)),
            )(self.inv_timescales)
            return signal.reshape(1, s_pad, D)

        # ---- explicit-position path ----
        if position.ndim != 2:
            raise ValueError(
                f"position must be 2-dimensional, got shape {position.shape}")
        B, S = position.shape
        s_pad = S + pad
        rows = B * s_pad
        TS = _pick_tile_rows(rows, D)
        n_r = pl.cdiv(rows, TS)

        if pad:
            # pad the (tiny) input once; mask pad rows in-kernel via `valid`.
            pos_in = jnp.pad(position, ((0, 0), (0, pad))).reshape(rows, 1)
            valid_row = jnp.concatenate(
                [jnp.ones((S,), jnp.float32), jnp.zeros((pad,), jnp.float32)])
            valid = jnp.broadcast_to(valid_row[None, :], (B, s_pad)).reshape(rows, 1)
            args = (pos_in, valid, self.inv_timescales)
            in_specs = [pl.BlockSpec((TS, 1), lambda r: (r, 0)),
                        pl.BlockSpec((TS, 1), lambda r: (r, 0)),
                        pl.BlockSpec((1, H), lambda r: (0, 0))]
        else:
            pos_in = position.reshape(rows, 1)      # original dtype; cast in kernel
            args = (pos_in, self.inv_timescales)
            in_specs = [pl.BlockSpec((TS, 1), lambda r: (r, 0)),
                        pl.BlockSpec((1, H), lambda r: (0, 0))]

        kernel = functools.partial(_posemb_pos_kernel, masked=bool(pad))
        signal = pl.pallas_call(
            kernel,
            out_shape=jax.ShapeDtypeStruct((rows, D), self.output_dtype),
            grid_spec=pltpu.PrefetchScalarGridSpec(
                num_scalar_prefetch=0,
                grid=(n_r,),
                in_specs=in_specs,
                out_specs=pl.BlockSpec((TS, D), lambda r: (r, 0)),
            ),
            compiler_params=pltpu.CompilerParams(
                dimension_semantics=("parallel",)),
        )(*args)
        return signal.reshape(B, s_pad, D)


# ---------------------------------------------------------------------------
# Pure-JAX reference (mirrors the PyTorch module exactly)
# ---------------------------------------------------------------------------
def _reference(position_f32, inv_timescales_2d, embedding_dims):
    scaled = position_f32[..., None] * inv_timescales_2d.reshape(1, 1, -1)
    sig = jnp.concatenate([jnp.sin(scaled), jnp.cos(scaled)], axis=2)
    pad_amt = embedding_dims % 2
    if pad_amt:
        sig = jnp.pad(sig, ((0, 0), (0, pad_amt), (0, 0)))
    return sig


if __name__ == "__main__":
    # --- small config matching the module spec (hidden=32, B=2, S=8) ---
    hidden_size = 32
    B, S = 2, 8
    mod = TimesFmPositionalEmbeddingPallas(hidden_size)
    key = jax.random.PRNGKey(0)
    position = jax.random.randint(key, (B, S), 0, 64)          # int32, cast in-kernel

    out_pos = jax.block_until_ready(mod(position=position))    # explicit positions
    out_seq = jax.block_until_ready(mod(seq_length=S))         # iota path

    ref_pos = _reference(position.astype(jnp.float32), mod.inv_timescales, hidden_size)
    ref_seq = _reference(jnp.arange(S, dtype=jnp.float32)[None, :],
                         mod.inv_timescales, hidden_size)
    assert out_pos.shape == (B, S, hidden_size)
    assert out_seq.shape == (1, S, hidden_size)
    assert jnp.allclose(out_pos, ref_pos, atol=1e-5, rtol=1e-5)
    assert jnp.allclose(out_seq, ref_seq, atol=1e-5, rtol=1e-5)

    # --- larger case exercising row tiling (partial last tile, H % 128 == 0) ---
    B2, S2, hidden2 = 2, 1100, 256
    mod2 = TimesFmPositionalEmbeddingPallas(hidden2)
    pos2 = jax.random.randint(jax.random.PRNGKey(1), (B2, S2), 0, 512)

    out2_pos = jax.block_until_ready(mod2(position=pos2))
    out2_seq = jax.block_until_ready(mod2(seq_length=S2))

    ref2_pos = _reference(pos2.astype(jnp.float32), mod2.inv_timescales, hidden2)
    ref2_seq = _reference(jnp.arange(S2, dtype=jnp.float32)[None, :],
                          mod2.inv_timescales, hidden2)
    assert out2_pos.shape == (B2, S2, hidden2)
    assert out2_seq.shape == (1, S2, hidden2)
    assert jnp.allclose(out2_pos, ref2_pos, atol=1e-4, rtol=1e-4)
    assert jnp.allclose(out2_seq, ref2_seq, atol=1e-4, rtol=1e-4)

    # --- odd hidden_size: F.pad on the sequence dim, folded into the kernel ---
    hidden3 = 33
    mod3 = TimesFmPositionalEmbeddingPallas(hidden3)
    pos3 = jax.random.randint(jax.random.PRNGKey(2), (B, S), 0, 64)

    out3_pos = jax.block_until_ready(mod3(position=pos3))
    out3_seq = jax.block_until_ready(mod3(seq_length=S))

    ref3_pos = _reference(pos3.astype(jnp.float32), mod3.inv_timescales, hidden3)
    ref3_seq = _reference(jnp.arange(S, dtype=jnp.float32)[None, :],
                          mod3.inv_timescales, hidden3)
    assert out3_pos.shape == (B, S + 1, hidden3 - 1)
    assert out3_seq.shape == (1, S + 1, hidden3 - 1)
    assert jnp.allclose(out3_pos, ref3_pos, atol=1e-5, rtol=1e-5)
    assert jnp.allclose(out3_seq, ref3_seq, atol=1e-5, rtol=1e-5)

    print("KERNEL_OK")
</pallas_src>

<mosaic_0001>
module attributes {stable_mosaic.version = 11 : i64} {
  func.func @_posemb_pos_kernel(%arg0: i32, %arg1: memref<8x1xi32, #tpu.memory_space<vmem>>, %arg2: memref<1x16xf32, #tpu.memory_space<vmem>>, %arg3: memref<8x32xf32, #tpu.memory_space<vmem>>) attributes {dimension_semantics = [#tpu.dimension_semantics<parallel>], iteration_bounds = array<i64: 2>, scalar_prefetch = 0 : i64, scratch_operands = 0 : i64, tpu.core_type = #tpu.core_type<tc>, window_params = [{transform_indices = @transform_0, window_bounds = array<i64: 8, 1>}, {pipeline_mode = #tpu.pipeline_mode<synchronous>, transform_indices = @transform_1, window_bounds = array<i64: 1, 16>}, {transform_indices = @transform_2, window_bounds = array<i64: 8, 32>}]} {
    %c0 = arith.constant 0 : index
    %c0_0 = arith.constant 0 : index
    %0 = vector.load %arg1[%c0, %c0_0] : memref<8x1xi32, #tpu.memory_space<vmem>>, vector<8x1xi32>
    %1 = arith.sitofp %0 : vector<8x1xi32> to vector<8x1xf32>
    %c0_1 = arith.constant 0 : index
    %c0_2 = arith.constant 0 : index
    %2 = vector.load %arg2[%c0_1, %c0_2] : memref<1x16xf32, #tpu.memory_space<vmem>>, vector<1x16xf32>
    %3 = vector.broadcast %1 : vector<8x1xf32> to vector<8x16xf32>
    %4 = vector.broadcast %2 : vector<1x16xf32> to vector<8x16xf32>
    %5 = arith.mulf %3, %4 : vector<8x16xf32>
    %cst = arith.constant 0.636619746 : f32
    %6 = vector.broadcast %cst : f32 to vector<8x16xf32>
    %7 = arith.mulf %5, %6 : vector<8x16xf32>
    %cst_3 = arith.constant 5.000000e-01 : f32
    %8 = vector.broadcast %cst_3 : f32 to vector<8x16xf32>
    %9 = arith.addf %7, %8 : vector<8x16xf32>
    %10 = math.floor %9 : vector<8x16xf32>
    %11 = arith.fptosi %10 : vector<8x16xf32> to vector<8x16xi32>
    %cst_4 = arith.constant 1.5703125 : f32
    %12 = vector.broadcast %cst_4 : f32 to vector<8x16xf32>
    %13 = arith.mulf %10, %12 : vector<8x16xf32>
    %14 = arith.subf %5, %13 : vector<8x16xf32>
    %cst_5 = arith.constant 4.83751297E-4 : f32
    %15 = vector.broadcast %cst_5 : f32 to vector<8x16xf32>
    %16 = arith.mulf %10, %15 : vector<8x16xf32>
    %17 = arith.subf %14, %16 : vector<8x16xf32>
    %cst_6 = arith.constant 7.549790e-08 : f32
    %18 = vector.broadcast %cst_6 : f32 to vector<8x16xf32>
    %19 = arith.mulf %10, %18 : vector<8x16xf32>
    %20 = arith.subf %17, %19 : vector<8x16xf32>
    %21 = arith.mulf %20, %20 : vector<8x16xf32>
    %cst_7 = arith.constant -1.95152956E-4 : f32
    %22 = vector.broadcast %cst_7 : f32 to vector<8x16xf32>
    %23 = arith.mulf %22, %21 : vector<8x16xf32>
    %cst_8 = arith.constant 0.00833216123 : f32
    %24 = vector.broadcast %cst_8 : f32 to vector<8x16xf32>
    %25 = arith.addf %23, %24 : vector<8x16xf32>
    %26 = arith.mulf %25, %21 : vector<8x16xf32>
    %cst_9 = arith.constant -0.166666552 : f32
    %27 = vector.broadcast %cst_9 : f32 to vector<8x16xf32>
    %28 = arith.addf %26, %27 : vector<8x16xf32>
    %29 = arith.mulf %28, %21 : vector<8x16xf32>
    %30 = arith.mulf %29, %20 : vector<8x16xf32>
    %31 = arith.addf %30, %20 : vector<8x16xf32>
    %cst_10 = arith.constant 2.44331568E-5 : f32
    %32 = vector.broadcast %cst_10 : f32 to vector<8x16xf32>
    %33 = arith.mulf %32, %21 : vector<8x16xf32>
    %cst_11 = arith.constant -0.00138873165 : f32
    %34 = vector.broadcast %cst_11 : f32 to vector<8x16xf32>
    %35 = arith.addf %33, %34 : vector<8x16xf32>
    %36 = arith.mulf %35, %21 : vector<8x16xf32>
    %cst_12 = arith.constant 0.0416666456 : f32
    %37 = vector.broadcast %cst_12 : f32 to vector<8x16xf32>
    %38 = arith.addf %36, %37 : vector<8x16xf32>
    %39 = arith.mulf %21, %21 : vector<8x16xf32>
    %40 = arith.mulf %38, %39 : vector<8x16xf32>
    %cst_13 = arith.constant 5.000000e-01 : f32
    %41 = vector.broadcast %cst_13 : f32 to vector<8x16xf32>
    %42 = arith.mulf %41, %21 : vector<8x16xf32>
    %43 = arith.subf %40, %42 : vector<8x16xf32>
    %cst_14 = arith.constant 1.000000e+00 : f32
    %44 = vector.broadcast %cst_14 : f32 to vector<8x16xf32>
    %45 = arith.addf %43, %44 : vector<8x16xf32>
    %c1_i32 = arith.constant 1 : i32
    %46 = vector.broadcast %c1_i32 : i32 to vector<8x16xi32>
    %47 = arith.andi %11, %46 : vector<8x16xi32>
    %c1_i32_15 = arith.constant 1 : i32
    %48 = vector.broadcast %c1_i32_15 : i32 to vector<8x16xi32>
    %49 = arith.cmpi eq, %47, %48 : vector<8x16xi32>
    %50 = arith.select %49, %45, %31 : vector<8x16xi1>, vector<8x16xf32>
    %51 = arith.select %49, %31, %45 : vector<8x16xi1>, vector<8x16xf32>
    %c2_i32 = arith.constant 2 : i32
    %52 = vector.broadcast %c2_i32 : i32 to vector<8x16xi32>
    %53 = arith.andi %11, %52 : vector<8x16xi32>
    %c0_i32 = arith.constant 0 : i32
    %54 = vector.broadcast %c0_i32 : i32 to vector<8x16xi32>
    %55 = arith.cmpi eq, %53, %54 : vector<8x16xi32>
    %cst_16 = arith.constant 0.000000e+00 : f32
    %56 = vector.broadcast %cst_16 : f32 to vector<8x16xf32>
    %57 = arith.subf %56, %50 : vector<8x16xf32>
    %58 = arith.select %55, %50, %57 : vector<8x16xi1>, vector<8x16xf32>
    %c1_i32_17 = arith.constant 1 : i32
    %59 = vector.broadcast %c1_i32_17 : i32 to vector<8x16xi32>
    %60 = arith.addi %11, %59 : vector<8x16xi32>
    %c2_i32_18 = arith.constant 2 : i32
    %61 = vector.broadcast %c2_i32_18 : i32 to vector<8x16xi32>
    %62 = arith.andi %60, %61 : vector<8x16xi32>
    %c0_i32_19 = arith.constant 0 : i32
    %63 = vector.broadcast %c0_i32_19 : i32 to vector<8x16xi32>
    %64 = arith.cmpi eq, %62, %63 : vector<8x16xi32>
    %cst_20 = arith.constant 0.000000e+00 : f32
    %65 = vector.broadcast %cst_20 : f32 to vector<8x16xf32>
    %66 = arith.subf %65, %51 : vector<8x16xf32>
    %67 = arith.select %64, %51, %66 : vector<8x16xi1>, vector<8x16xf32>
    %c0_21 = arith.constant 0 : index
    %c0_22 = arith.constant 0 : index
    %68 = vector.load %arg3[%c0_21, %c0_22] : memref<8x32xf32, #tpu.memory_space<vmem>>, vector<8x16xf32>
    tpu.vector_store %arg3[%c0_21, %c0_22], %58 {strides = array<i32>} : memref<8x32xf32, #tpu.memory_space<vmem>>, vector<8x16xf32>,
    %c0_23 = arith.constant 0 : index
    %c16 = arith.constant 16 : index
    %69 = vector.load %arg3[%c0_23, %c16] : memref<8x32xf32, #tpu.memory_space<vmem>>, vector<8x16xf32>
    tpu.vector_store %arg3[%c0_23, %c16], %67 {strides = array<i32>} : memref<8x32xf32, #tpu.memory_space<vmem>>, vector<8x16xf32>,
    return
  }
  func.func @transform_0(%arg0: i32) -> (i32, i32) {
    %c0_i32 = arith.constant 0 : i32
    %c0_i32_0 = arith.constant 0 : i32
    return %arg0, %c0_i32 : i32, i32
  }
  func.func @transform_1(%arg0: i32) -> (i32, i32) {
    %c0_i32 = arith.constant 0 : i32
    %c0_i32_0 = arith.constant 0 : i32
    %c0_i32_1 = arith.constant 0 : i32
    return %c0_i32, %c0_i32_0 : i32, i32
  }
  func.func @transform_2(%arg0: i32) -> (i32, i32) {
    %c0_i32 = arith.constant 0 : i32
    %c0_i32_0 = arith.constant 0 : i32
    return %arg0, %c0_i32 : i32, i32
  }
}

</mosaic_0001>

<llo_original>
// kernel: tpu_custom_call.1
$region0: #{tpu_custom_call.1}
  #allocation0 [shape = 'u32[]', space=smem, size = 0x4, offset = 0x4, fixed_abs, tag = 'smem constant byte address 0x4 - core index']
  #allocation1 [shape = 'u32[72,128]{1,0:T(1,128)}', space=vmem, size = 0x9000, scoped, tag = 'internal scratch']
  %s0 = inlined_call_operand.vmem [shape: s32[16,1], index: 0, kind: input, shape index: {}]
  %s1 = inlined_call_operand.vmem [shape: f32[1,16], index: 1, kind: input, shape index: {}]
  %s2 = inlined_call_operand.hbm [shape: f32[16,32], index: 2, kind: output, shape index: {}]
  %s3 = sld [smem:[#allocation0]]
  $region41: #{tpu_custom_call.1} parent=0
    _
  %s5 = ssub.s32 1, %s3
  %s6 = scalar_select 0, %s5, %s3
  $region1: #{tpu_custom_call.1} parent=0
    #allocation2 [shape = 'u8[8192]{0}', space=vmem, size = 0x2000, scoped, tag = 'output window, operand 0']
    #allocation3 [shape = 's32[2]{0}', space=sflag, size = 0x8, scoped, tag = 'scoped memory for tpu_custom_call.1']
    %7 = vsyncpa [#allocation3], 0
    %s8 = scalar_lea.sflag [#allocation3], 1
    %9 = vsyncpa %s8, 0
    loop: start=0, step=1, limit=4
    $region2: #{tpu_custom_call.1} parent=1 // loop_pre_header
      _
    $region3: #{tpu_custom_call.1} parent=1 // loop_header
      %s11 = sphi 0, %s15
      %p12 = scmp.ge.s32.totalorder %s11, 4
      %s21 = sphi 0, %s23
      %s24 = sphi 0, %s21
      %s25 = sphi 0, %s24
      %s41 = sphi 0, %s25
      %s45 = sphi 0, %s45
      %s47 = sphi 0, %s45
      %s48 = sphi 0, %s47
      %s62 = sphi 0, %s48
      %s68 = sphi 0, %s70
      %s71 = sphi 0, %s68
      %s72 = sphi 0, %s71
      %s88 = sphi 0, %s72
    $region4: #{tpu_custom_call.1} parent=1 // loop_header_branch
      %14 = sbr.rel (%p12) target = $region8
    $region5: #{tpu_custom_call.1} parent=1 // loop_body
      %s16 = ssub.s32 %s11, 1
      %s17 = ssub.s32 %s11, 2
      %s18 = sadd.s32 %s11, 1
      %s19 = ssub.s32 %s11, %s18
      %p20 = scmp.eq.s32.totalorder %s19, 0
      %s22 = sadd.s32 %s21, 1
      %s23 = scalar_select %p20, %s21, %s22
      %p26 = pneg %p20
      %p27 = scmp.eq.s32.totalorder %s11, 1
      %p28 = por %p26, %p27
      %p29 = scmp.ne.s32.totalorder %s21, %s24
      %p30 = scmp.eq.s32.totalorder %s11, 0
      %p31 = por %p29, %p30
      %p32 = scmp.ne.s32.totalorder %s21, %s24
      %p33 = scmp.eq.s32.totalorder %s16, 1
      %p34 = por %p32, %p33
      %p35 = scmp.ne.s32.totalorder %s24, %s25
      %p36 = scmp.eq.s32.totalorder %s16, 0
      %p37 = por %p35, %p36
      %p38 = scmp.ne.s32.totalorder %s24, %s25
      %p39 = scmp.eq.s32.totalorder %s17, 1
      %p40 = por %p38, %p39
      %p42 = scmp.ne.s32.totalorder %s25, %s41
      %p43 = scmp.eq.s32.totalorder %s17, 0
      %p44 = por %p42, %p43
      %s46 = sadd.s32 %s45, 1
      %p49 = scmp.eq.s32.totalorder %s11, 1
      %p50 = scmp.ne.s32.totalorder %s45, %s47
      %p51 = scmp.eq.s32.totalorder %s11, 0
      %p52 = por %p50, %p51
      %p53 = scmp.ne.s32.totalorder %s45, %s47
      %p54 = scmp.eq.s32.totalorder %s16, 1
      %p55 = por %p53, %p54
      %p56 = scmp.ne.s32.totalorder %s47, %s48
      %p57 = scmp.eq.s32.totalorder %s16, 0
      %p58 = por %p56, %p57
      %p59 = scmp.ne.s32.totalorder %s47, %s48
      %p60 = scmp.eq.s32.totalorder %s17, 1
      %p61 = por %p59, %p60
      %p63 = scmp.ne.s32.totalorder %s48, %s62
      %p64 = scmp.eq.s32.totalorder %s17, 0
      %p65 = por %p63, %p64
      %s66 = ssub.s32 %s11, %s18
      %p67 = scmp.eq.s32.totalorder %s66, 0
      %s69 = sadd.s32 %s68, 1
      %s70 = scalar_select %p67, %s68, %s69
      %p73 = pneg %p67
      %p74 = scmp.eq.s32.totalorder %s11, 1
      %p75 = por %p73, %p74
      %p76 = scmp.ne.s32.totalorder %s68, %s71
      %p77 = scmp.eq.s32.totalorder %s11, 0
      %p78 = por %p76, %p77
      %p79 = scmp.ne.s32.totalorder %s68, %s71
      %p80 = scmp.eq.s32.totalorder %s16, 1
      %p81 = por %p79, %p80
      %p82 = scmp.ne.s32.totalorder %s71, %s72
      %p83 = scmp.eq.s32.totalorder %s16, 0
      %p84 = por %p82, %p83
      %p85 = scmp.ne.s32.totalorder %s71, %s72
      %p86 = scmp.eq.s32.totalorder %s17, 1
      %p87 = por %p85, %p86
      %p89 = scmp.ne.s32.totalorder %s72, %s88
      %p90 = scmp.eq.s32.totalorder %s17, 0
      %p91 = por %p89, %p90
      %p92 = scmp.le.s32.totalorder 1, %s11
      %p93 = scmp.lt.s32.totalorder %s11, 3
      %p94 = pnand %p92, %p93
      %p95 = pneg %p94
      // Predicated region
      $region9: #{tpu_custom_call.1} parent=5 // pred_check
        _
      $region10: #{tpu_custom_call.1} parent=5 // pred_check_branch
        %97 = sbr.rel (%p94) target = $region12
      $region11: #{tpu_custom_call.1} parent=5 // pred_region
        %s98 = ssub.s32 %s11, 1
        // Predicated region
        $region13: #{tpu_custom_call.1} parent=11 // pred_check
          %p99 = pneg %p58
        $region14: #{tpu_custom_call.1} parent=11 // pred_check_branch
          %101 = sbr.rel (%p99) target = $region16
        $region15: #{tpu_custom_call.1} parent=11 // pred_region
          _
        $region16: #{tpu_custom_call.1} parent=11 // pred_fallthru
          _
      $region12: #{tpu_custom_call.1} parent=5 // pred_fallthru
        _
      %p102 = scmp.lt.s32.totalorder %s11, 2
      // Predicated region
      $region17: #{tpu_custom_call.1} parent=5 // pred_check
        %p103 = pneg %p102
      $region18: #{tpu_custom_call.1} parent=5 // pred_check_branch
        %105 = sbr.rel (%p103) target = $region20
      $region19: #{tpu_custom_call.1} parent=5 // pred_region
        // Predicated region
        $region21: #{tpu_custom_call.1} parent=19 // pred_check
          %p106 = pneg %p31
        $region22: #{tpu_custom_call.1} parent=19 // pred_check_branch
          %108 = sbr.rel (%p106) target = $region24
        $region23: #{tpu_custom_call.1} parent=19 // pred_region
          %p109 = scmp.lt.s32.totalorder %s11, 1
          %s110 = scalar_select %p109, %s11, 1
          %s111 = smul.addr %s110, 8
          %s112 = scalar_lea.vmem %s0, %s111
        $region24: #{tpu_custom_call.1} parent=19 // pred_fallthru
          _
      $region20: #{tpu_custom_call.1} parent=5 // pred_fallthru
        _
      %p113 = scmp.le.s32.totalorder 1, %s11
      %p114 = scmp.lt.s32.totalorder %s11, 3
      %p115 = pnand %p113, %p114
      %p116 = pneg %p115
      // Predicated region
      $region25: #{tpu_custom_call.1} parent=5 // pred_check
        _
      $region26: #{tpu_custom_call.1} parent=5 // pred_check_branch
        %118 = sbr.rel (%p115) target = $region28
      $region27: #{tpu_custom_call.1} parent=5 // pred_region
        %s119 = ssub.s32 %s11, 1
        %p120 = scmp.lt.s32.totalorder %s16, 1
        %s121 = scalar_select %p120, %s16, 1
        %s122 = smul.addr %s121, 8
        %s123 = scalar_lea.vmem %s0, %s122
        %p124 = pneg %p37
        %p125 = pneg %p34
        %p126 = pneg %p58
        %p127 = pneg %p55
        %p128 = pneg %p84
        %p129 = pneg %p81
        %s130 = sand.u32 %s71, 1
        %s131 = scalar_lea.sflag [#allocation3], %s130
        %s132 = sand.u32 %s71, 1
        %s133 = smul.addr %s132, 8
        %s134 = scalar_lea.vmem [#allocation2], %s133
        %p135 = scmp.lt.s32.totalorder %s16, 1
        %s136 = scalar_select %p135, %s16, 1
        %s137 = smul.addr %s136, 8
        %s138 = scalar_lea.vmem %s0, %s137
        %v139 = vld [vmem:[%s138] sm:$0xff]
        %v140 = vcvt.s32.f32 %v139
        %v141 = vld [vmem:[%s1] sm:$0x1]
        %143 = vset.pattern.permute.xlu0 0
        %144 = vperm.xlu0 %143, %v140
        %v145 = vpop.permute.xlu0 %144
        %v148 = vperm.slane %v141, 0
        %v150 = vmul.f32 %v145, %v148
        %v151 = vmul.f32 %v150, 0.63661975
        %v152 = vadd.f32 %v151, 0.5
        %v153 = vfloor.f32 %v152
        %v154 = vcvt.f32.s32.to.zero.pseudo %v153
        %v155 = vmul.f32 %v153, 1.5703125
        %v156 = vsub.f32 %v150, %v155
        %v157 = vmul.f32 %v153, 0.0004837513
        %v158 = vsub.f32 %v156, %v157
        %v159 = vmul.f32 %v153, 7.54979e-08
        %v160 = vsub.f32 %v158, %v159
        %v161 = vmul.f32 %v160, %v160
        %v162 = vmul.f32 %v161, -0.00019515296
        %v163 = vadd.f32 %v162, 0.008332161
        %v164 = vmul.f32 %v163, %v161
        %v165 = vadd.f32 %v164, -0.16666655
        %v166 = vmul.f32 %v165, %v161
        %v167 = vmul.f32 %v166, %v160
        %v168 = vadd.f32 %v167, %v160
        %v169 = vmul.f32 %v161, 2.4433157e-05
        %v170 = vadd.f32 %v169, -0.0013887316
        %v171 = vmul.f32 %v170, %v161
        %v172 = vadd.f32 %v171, 0.041666646
        %v173 = vmul.f32 %v161, %v161
        %v174 = vmul.f32 %v172, %v173
        %v175 = vmul.f32 %v161, 0.5
        %v176 = vsub.f32 %v174, %v175
        %v177 = vadd.f32 %v176, 1.0
        %v178 = vand.u32 %v154, 1
        %vm179 = vcmp.eq.s32.totalorder %v178, 1
        %v180 = vsel %vm179, %v177, %v168
        %v181 = vsel %vm179, %v168, %v177
        %v182 = vand.u32 %v154, 2
        %vm183 = vcmp.eq.s32.totalorder %v182, 0
        %v184 = vsub.f32 0.0, %v180
        %v185 = vsel %vm183, %v180, %v184
        %v186 = vadd.s32 %v154, 1
        %v187 = vand.u32 %v186, 2
        %vm188 = vcmp.eq.s32.totalorder %v187, 0
        %v189 = vsub.f32 0.0, %v181
        %v190 = vsel %vm188, %v181, %v189
        %vm191 = vcmask 130048
        %192 = vst.msk [vmem:[%s134] sm:$0xff] %vm191, %v185
        %194 = vrot.lane.b32.xlu0 %v190, 16
        %v195 = vpop.permute.xlu0 %194
        %vm197 = vcmask 261248
        %198 = vst.msk [vmem:[%s134] sm:$0xff] %vm197, %v195
        %s199 = sand.u32 %s71, 1
        %s200 = scalar_lea.sflag [#allocation3], %s199
        %s201 = sand.u32 %s71, 1
        %s202 = smul.addr %s201, 8
        %s203 = scalar_lea.vmem [#allocation2], %s202
        // Predicated region
        $region29: #{tpu_custom_call.1} parent=27 // pred_check
          %p204 = pneg %p81
        $region30: #{tpu_custom_call.1} parent=27 // pred_check_branch
          %206 = sbr.rel (%p204) target = $region32
        $region31: #{tpu_custom_call.1} parent=27 // pred_region
          %208 = vsyncadd %s200, 0
          %s209 = smul.addr %s16, 8
          %s210 = scalar_lea.hbm %s2, %s209
          %s212 = sshll.u32 %s203, 4
          %s213 = int_to_ptr.vmem [resolvable:$true] %s212
          %s214 = sshll.u32 %s210, 4
          %s215 = int_to_ptr.hbm [resolvable:$true] %s214
          %217 = dma.vmem_to_hbm [thread:$0]  %s213, 128, %s215, %s200
        $region32: #{tpu_custom_call.1} parent=27 // pred_fallthru
          _
      $region28: #{tpu_custom_call.1} parent=5 // pred_fallthru
        _
      %p218 = scmp.le.s32.totalorder 2, %s11
      // Predicated region
      $region33: #{tpu_custom_call.1} parent=5 // pred_check
        %p219 = pneg %p218
      $region34: #{tpu_custom_call.1} parent=5 // pred_check_branch
        %221 = sbr.rel (%p219) target = $region36
      $region35: #{tpu_custom_call.1} parent=5 // pred_region
        %s222 = ssub.s32 %s11, 2
        // Predicated region
        $region37: #{tpu_custom_call.1} parent=35 // pred_check
          %p223 = pneg %p87
        $region38: #{tpu_custom_call.1} parent=35 // pred_check_branch
          %225 = sbr.rel (%p223) target = $region40
        $region39: #{tpu_custom_call.1} parent=35 // pred_region
          %s226 = sand.u32 %s72, 1
          %s227 = scalar_lea.sflag [#allocation3], %s226
          %s228 = sand.u32 %s72, 1
          %s229 = smul.addr %s228, 8
          %s230 = scalar_lea.vmem [#allocation2], %s229
          %232 = dma.done %s227, 128
        $region40: #{tpu_custom_call.1} parent=35 // pred_fallthru
          _
      $region36: #{tpu_custom_call.1} parent=5 // pred_fallthru
        _
    $region6: #{tpu_custom_call.1} parent=1 // loop_footer
      %s15 = sadd.s32 1, %s11
    $region7: #{tpu_custom_call.1} parent=1 // loop_footer_branch
      %10 = sbr.rel target = $region3
    $region8: #{tpu_custom_call.1} parent=1 // loop_exit
      _
    %233 = vsyncpa [#allocation3], 1
    %s234 = scalar_lea.sflag [#allocation3], 1
    %235 = vsyncpa %s234, 1

</llo_original>
